<compile_context>
chip_gen: v5e
topology: v5e:2x2
jax: 0.10.0
libtpu: 0.0.40
codegen_flags: <defaults>
</compile_context>

<pallas_src>
import jax
import jax.numpy as jnp
from jax.experimental import pallas as pl
from jax.experimental.pallas import tpu as pltpu

INPUT_SIZE = 13
HIDDEN_SIZE = 6
OUTPUT_SIZE = 1

GATE_LANES = 32                 # lanes reserved per gate (>= HIDDEN_SIZE)
GATES_W = 4 * GATE_LANES        # packed gate plane width = 128 (one vreg wide)


# -----------------------------------------------------------------------------
# Pallas kernel: full LSTM recurrence + output projection (gridless, VMEM-resident)
# -----------------------------------------------------------------------------
def lstm_kernel(seq_ref, wx_ref, wh_ref, b_ref, whq_ref, bq_ref,
                y_ref, h_ref, c_ref):
    """Layout invariant (keeps padded lanes exactly zero through the recurrence):
    gate k occupies lanes [k*GATE_LANES, k*GATE_LANES + HIDDEN_SIZE) of the
    128-lane gate plane; all other weight columns / bias lanes are zero, h0/c0
    are zero and padded batch rows of seq are zero, so padded gate
    pre-activations are 0 -> i/f/o = 0.5, c_bar = 0 and the padded lanes of
    c/h remain exactly 0 every step.  NOTE: this silently breaks if nonzero
    initial state or nonzero padding is ever introduced.
    """
    T, BP, D = seq_ref.shape
    G = wx_ref.shape[1]          # 128 = 4 * GATE_LANES
    GL = G // 4                  # 32

    # --- Prologue: all T input projections in ONE MXU matmul + one bias add.
    #     (Amortized over the whole sequence, off the serial chain; kept as a
    #     traced value, no VMEM scratch round trip.)
    x_all = seq_ref[...].reshape(T * BP, D)
    gx = (jnp.dot(x_all, wx_ref[...], preferred_element_type=jnp.float32)
          + b_ref[...])
    gx = gx.reshape(T, BP, G)

    wh = wh_ref[...]             # (GL, G) recurrent weights, loaded once

    h = jnp.zeros((BP, GL), jnp.float32)
    c = jnp.zeros((BP, GL), jnp.float32)

    # --- Recurrence (serial latency chain), statically unrolled.  Per step:
    #     one (BP,GL)@(GL,G) matmul on a single 128-wide weight tile, one
    #     sigmoid + one tanh over the packed 128-lane gate plane, one tanh(c).
    for t in range(T):
        gates = gx[t] + jnp.dot(h, wh, preferred_element_type=jnp.float32)
        sig = jax.nn.sigmoid(gates)          # lanes: [ i | f | o | (unused) ]
        th = jnp.tanh(gates)                 # lanes: [ (unused)   | c_bar   ]
        i_g = sig[:, 0 * GL:1 * GL]
        f_g = sig[:, 1 * GL:2 * GL]
        o_g = sig[:, 2 * GL:3 * GL]
        c_bar = th[:, 3 * GL:4 * GL]
        c = f_g * c + i_g * c_bar
        h = o_g * jnp.tanh(c)

    # --- Epilogue: output projection + full-ref stores (outputs are ~1 KiB each;
    #     lane density is immaterial at this size).
    y = (jnp.dot(h, whq_ref[...], preferred_element_type=jnp.float32)
         + bq_ref[...])
    y_ref[...] = y
    h_ref[...] = h
    c_ref[...] = c


# -----------------------------------------------------------------------------
# One-time parameter packing (hoisted out of the per-call path per perf review)
# -----------------------------------------------------------------------------
def pack_params(params):
    """Pack module parameters into the kernel's lane-aligned layout.  Run ONCE
    at parameter-setup time, not per forward call."""
    wx, wh, b, whq, bq = params      # (D,4H), (H,4H), (1,4H), (H,O), (1,O)
    Hh = wh.shape[0]
    O = whq.shape[1]
    GL, G = GATE_LANES, GATES_W

    def pad_gates(w):                # (rows, 4H) -> (rows, G); gate k -> lanes k*GL..
        rows = w.shape[0]
        out = jnp.zeros((rows, G), jnp.float32)
        for k in range(4):
            out = out.at[:, k * GL:k * GL + Hh].set(w[:, k * Hh:(k + 1) * Hh])
        return out

    wx_p = pad_gates(wx)                                                  # (D, G)
    wh_p = jnp.zeros((GL, G), jnp.float32).at[:Hh, :].set(pad_gates(wh))  # (GL, G)
    b_p = pad_gates(b)                                                    # (1, G)
    whq_p = jnp.zeros((GL, GL), jnp.float32).at[:Hh, :O].set(whq)         # (GL, GL)
    bq_p = jnp.zeros((1, GL), jnp.float32).at[:, :O].set(bq)              # (1, GL)
    return wx_p, wh_p, b_p, whq_p, bq_p


# -----------------------------------------------------------------------------
# Jitted forward wrapper
# -----------------------------------------------------------------------------
@jax.jit
def lstm_forward(seq, packed):
    """seq: (B, T, D_in) float32; packed = pack_params(params).
    Returns (Y, (H, C)) like the PyTorch module."""
    wx_p, wh_p, b_p, whq_p, bq_p = packed
    B, T, D = seq.shape
    GL = GATE_LANES
    BP = max(8, ((B + 7) // 8) * 8)     # pad batch to a full sublane group

    # Time-major + zero batch padding.  Under jit this is one tiny fused op
    # (~3 KiB) ahead of the pallas_call; the eager per-call dispatch cost
    # flagged by the review is gone.
    # TODO(synk): fold the (B,T,D)->(T,BP,D) relayout into the kernel prologue
    # if this fusion ever shows up in profiles.
    seq_tm = jnp.transpose(seq, (1, 0, 2))
    seq_tm = jnp.pad(seq_tm, ((0, 0), (0, BP - B), (0, 0)))

    vmem = pl.BlockSpec(memory_space=pltpu.MemorySpace.VMEM)
    y_p, h_p, c_p = pl.pallas_call(
        lstm_kernel,
        out_shape=(jax.ShapeDtypeStruct((BP, GL), jnp.float32),
                   jax.ShapeDtypeStruct((BP, GL), jnp.float32),
                   jax.ShapeDtypeStruct((BP, GL), jnp.float32)),
        in_specs=[vmem] * 6,
        out_specs=[vmem] * 3,
    )(seq_tm, wx_p, wh_p, b_p, whq_p, bq_p)

    y = y_p[:B, :OUTPUT_SIZE]
    h = h_p[:B, :HIDDEN_SIZE]
    c = c_p[:B, :HIDDEN_SIZE]
    return y, (h, c)


# -----------------------------------------------------------------------------
# Deterministic parameter init (xavier-normal matrices, zero biases)
# -----------------------------------------------------------------------------
def init_params(key):
    def xavier(k, shape):
        fan_in, fan_out = shape
        std = (2.0 / (fan_in + fan_out)) ** 0.5
        return std * jax.random.normal(k, shape, jnp.float32)

    keys = jax.random.split(key, 9)
    W_xi = xavier(keys[0], (INPUT_SIZE, HIDDEN_SIZE))
    W_hi = xavier(keys[1], (HIDDEN_SIZE, HIDDEN_SIZE))
    W_xf = xavier(keys[2], (INPUT_SIZE, HIDDEN_SIZE))
    W_hf = xavier(keys[3], (HIDDEN_SIZE, HIDDEN_SIZE))
    W_xo = xavier(keys[4], (INPUT_SIZE, HIDDEN_SIZE))
    W_ho = xavier(keys[5], (HIDDEN_SIZE, HIDDEN_SIZE))
    W_xc = xavier(keys[6], (INPUT_SIZE, HIDDEN_SIZE))
    W_hc = xavier(keys[7], (HIDDEN_SIZE, HIDDEN_SIZE))
    W_hq = xavier(keys[8], (HIDDEN_SIZE, OUTPUT_SIZE))

    # Gates packed in order [i, f, o, c]; biases zero as in the module.
    wx = jnp.concatenate([W_xi, W_xf, W_xo, W_xc], axis=1)   # (D_in, 4H)
    wh = jnp.concatenate([W_hi, W_hf, W_ho, W_hc], axis=1)   # (H, 4H)
    b = jnp.zeros((1, 4 * HIDDEN_SIZE), jnp.float32)
    bq = jnp.zeros((1, OUTPUT_SIZE), jnp.float32)
    return wx, wh, b, W_hq, bq


# -----------------------------------------------------------------------------
# Pure-JAX reference (mirrors the PyTorch forward loop)
# -----------------------------------------------------------------------------
def lstm_ref(seq, params):
    wx, wh, b, whq, bq = params
    B, T, _ = seq.shape
    Hh = wh.shape[0]
    h = jnp.zeros((B, Hh), jnp.float32)
    c = jnp.zeros((B, Hh), jnp.float32)
    for t in range(T):
        x = seq[:, t, :]
        gates = x @ wx + h @ wh + b
        i_g = jax.nn.sigmoid(gates[:, 0 * Hh:1 * Hh])
        f_g = jax.nn.sigmoid(gates[:, 1 * Hh:2 * Hh])
        o_g = jax.nn.sigmoid(gates[:, 2 * Hh:3 * Hh])
        c_t = jnp.tanh(gates[:, 3 * Hh:4 * Hh])
        c = f_g * c + i_g * c_t
        h = o_g * jnp.tanh(c)
    y = h @ whq + bq
    return y, (h, c)


if __name__ == "__main__":
    key = jax.random.PRNGKey(0)
    pkey, xkey = jax.random.split(key)
    params = init_params(pkey)
    packed = pack_params(params)          # one-time packing, outside hot path

    B, T = 2, 8
    seq = jax.random.normal(xkey, (B, T, INPUT_SIZE), jnp.float32)

    y, (h, c) = lstm_forward(seq, packed)
    jax.block_until_ready((y, h, c))

    y_ref, (h_ref, c_ref) = lstm_ref(seq, params)
    assert jnp.allclose(y, y_ref, atol=1e-5), "Y mismatch vs reference"
    assert jnp.allclose(h, h_ref, atol=1e-5), "H mismatch vs reference"
    assert jnp.allclose(c, c_ref, atol=1e-5), "C mismatch vs reference"

    print("KERNEL_OK")
</pallas_src>

<mosaic_0001>
module attributes {stable_mosaic.version = 11 : i64} {
  func.func @lstm_kernel(%arg0: memref<8x8x13xf32, #tpu.memory_space<vmem>>, %arg1: memref<13x128xf32, #tpu.memory_space<vmem>>, %arg2: memref<32x128xf32, #tpu.memory_space<vmem>>, %arg3: memref<1x128xf32, #tpu.memory_space<vmem>>, %arg4: memref<32x32xf32, #tpu.memory_space<vmem>>, %arg5: memref<1x32xf32, #tpu.memory_space<vmem>>, %arg6: memref<8x32xf32, #tpu.memory_space<vmem>>, %arg7: memref<8x32xf32, #tpu.memory_space<vmem>>, %arg8: memref<8x32xf32, #tpu.memory_space<vmem>>) attributes {dimension_semantics = [], scalar_prefetch = 0 : i64, scratch_operands = 0 : i64, tpu.core_type = #tpu.core_type<tc>} {
    %c0 = arith.constant 0 : index
    %c0_0 = arith.constant 0 : index
    %c0_1 = arith.constant 0 : index
    %0 = vector.load %arg0[%c0, %c0_0, %c0_1] : memref<8x8x13xf32, #tpu.memory_space<vmem>>, vector<8x8x13xf32>
    %1 = vector.shape_cast %0 : vector<8x8x13xf32> to vector<64x13xf32>
    %c0_2 = arith.constant 0 : index
    %c0_3 = arith.constant 0 : index
    %2 = vector.load %arg1[%c0_2, %c0_3] : memref<13x128xf32, #tpu.memory_space<vmem>>, vector<13x128xf32>
    %cst = arith.constant dense<0.000000e+00> : vector<64x128xf32>
    %3 = tpu.matmul %1, %2, %cst {dimension_numbers = #tpu.dot_dimension_numbers<[1], [0], [0], [1], [0, 0, 1, 1], [], []>} : vector<64x13xf32>, vector<13x128xf32>, vector<64x128xf32> -> vector<64x128xf32>
    %c0_4 = arith.constant 0 : index
    %c0_5 = arith.constant 0 : index
    %4 = vector.load %arg3[%c0_4, %c0_5] : memref<1x128xf32, #tpu.memory_space<vmem>>, vector<1x128xf32>
    %5 = vector.broadcast %4 : vector<1x128xf32> to vector<64x128xf32>
    %6 = arith.addf %3, %5 : vector<64x128xf32>
    %7 = vector.shape_cast %6 : vector<64x128xf32> to vector<8x8x128xf32>
    %c0_6 = arith.constant 0 : index
    %c0_7 = arith.constant 0 : index
    %8 = vector.load %arg2[%c0_6, %c0_7] : memref<32x128xf32, #tpu.memory_space<vmem>>, vector<32x128xf32>
    %cst_8 = arith.constant 0.000000e+00 : f32
    %9 = vector.broadcast %cst_8 : f32 to vector<8x32xf32>
    %cst_9 = arith.constant 0.000000e+00 : f32
    %10 = vector.broadcast %cst_9 : f32 to vector<8x32xf32>
    %11 = vector.extract_strided_slice %7 {offsets = [0, 0, 0], sizes = [1, 8, 128], strides = [1, 1, 1]} : vector<8x8x128xf32> to vector<1x8x128xf32>
    %12 = vector.shape_cast %11 : vector<1x8x128xf32> to vector<8x128xf32>
    %cst_10 = arith.constant dense<0.000000e+00> : vector<8x128xf32>
    %13 = tpu.matmul %9, %8, %cst_10 {dimension_numbers = #tpu.dot_dimension_numbers<[1], [0], [0], [1], [0, 0, 1, 1], [], []>} : vector<8x32xf32>, vector<32x128xf32>, vector<8x128xf32> -> vector<8x128xf32>
    %14 = arith.addf %12, %13 : vector<8x128xf32>
    %15 = arith.negf %14 : vector<8x128xf32>
    %16 = math.exp %15 : vector<8x128xf32>
    %cst_11 = arith.constant 1.000000e+00 : f32
    %17 = vector.broadcast %cst_11 : f32 to vector<8x128xf32>
    %18 = arith.addf %17, %16 : vector<8x128xf32>
    %19 = arith.divf %17, %18 : vector<8x128xf32>
    %20 = math.tanh %14 : vector<8x128xf32>
    %21 = vector.extract_strided_slice %19 {offsets = [0, 0], sizes = [8, 32], strides = [1, 1]} : vector<8x128xf32> to vector<8x32xf32>
    %22 = vector.extract_strided_slice %19 {offsets = [0, 32], sizes = [8, 32], strides = [1, 1]} : vector<8x128xf32> to vector<8x32xf32>
    %23 = vector.extract_strided_slice %19 {offsets = [0, 64], sizes = [8, 32], strides = [1, 1]} : vector<8x128xf32> to vector<8x32xf32>
    %24 = vector.extract_strided_slice %20 {offsets = [0, 96], sizes = [8, 32], strides = [1, 1]} : vector<8x128xf32> to vector<8x32xf32>
    %25 = arith.mulf %22, %10 : vector<8x32xf32>
    %26 = arith.mulf %21, %24 : vector<8x32xf32>
    %27 = arith.addf %25, %26 : vector<8x32xf32>
    %28 = math.tanh %27 : vector<8x32xf32>
    %29 = arith.mulf %23, %28 : vector<8x32xf32>
    %30 = vector.extract_strided_slice %7 {offsets = [1, 0, 0], sizes = [1, 8, 128], strides = [1, 1, 1]} : vector<8x8x128xf32> to vector<1x8x128xf32>
    %31 = vector.shape_cast %30 : vector<1x8x128xf32> to vector<8x128xf32>
    %cst_12 = arith.constant dense<0.000000e+00> : vector<8x128xf32>
    %32 = tpu.matmul %29, %8, %cst_12 {dimension_numbers = #tpu.dot_dimension_numbers<[1], [0], [0], [1], [0, 0, 1, 1], [], []>} : vector<8x32xf32>, vector<32x128xf32>, vector<8x128xf32> -> vector<8x128xf32>
    %33 = arith.addf %31, %32 : vector<8x128xf32>
    %34 = arith.negf %33 : vector<8x128xf32>
    %35 = math.exp %34 : vector<8x128xf32>
    %cst_13 = arith.constant 1.000000e+00 : f32
    %36 = vector.broadcast %cst_13 : f32 to vector<8x128xf32>
    %37 = arith.addf %36, %35 : vector<8x128xf32>
    %38 = arith.divf %36, %37 : vector<8x128xf32>
    %39 = math.tanh %33 : vector<8x128xf32>
    %40 = vector.extract_strided_slice %38 {offsets = [0, 0], sizes = [8, 32], strides = [1, 1]} : vector<8x128xf32> to vector<8x32xf32>
    %41 = vector.extract_strided_slice %38 {offsets = [0, 32], sizes = [8, 32], strides = [1, 1]} : vector<8x128xf32> to vector<8x32xf32>
    %42 = vector.extract_strided_slice %38 {offsets = [0, 64], sizes = [8, 32], strides = [1, 1]} : vector<8x128xf32> to vector<8x32xf32>
    %43 = vector.extract_strided_slice %39 {offsets = [0, 96], sizes = [8, 32], strides = [1, 1]} : vector<8x128xf32> to vector<8x32xf32>
    %44 = arith.mulf %41, %27 : vector<8x32xf32>
    %45 = arith.mulf %40, %43 : vector<8x32xf32>
    %46 = arith.addf %44, %45 : vector<8x32xf32>
    %47 = math.tanh %46 : vector<8x32xf32>
    %48 = arith.mulf %42, %47 : vector<8x32xf32>
    %49 = vector.extract_strided_slice %7 {offsets = [2, 0, 0], sizes = [1, 8, 128], strides = [1, 1, 1]} : vector<8x8x128xf32> to vector<1x8x128xf32>
    %50 = vector.shape_cast %49 : vector<1x8x128xf32> to vector<8x128xf32>
    %cst_14 = arith.constant dense<0.000000e+00> : vector<8x128xf32>
    %51 = tpu.matmul %48, %8, %cst_14 {dimension_numbers = #tpu.dot_dimension_numbers<[1], [0], [0], [1], [0, 0, 1, 1], [], []>} : vector<8x32xf32>, vector<32x128xf32>, vector<8x128xf32> -> vector<8x128xf32>
    %52 = arith.addf %50, %51 : vector<8x128xf32>
    %53 = arith.negf %52 : vector<8x128xf32>
    %54 = math.exp %53 : vector<8x128xf32>
    %cst_15 = arith.constant 1.000000e+00 : f32
    %55 = vector.broadcast %cst_15 : f32 to vector<8x128xf32>
    %56 = arith.addf %55, %54 : vector<8x128xf32>
    %57 = arith.divf %55, %56 : vector<8x128xf32>
    %58 = math.tanh %52 : vector<8x128xf32>
    %59 = vector.extract_strided_slice %57 {offsets = [0, 0], sizes = [8, 32], strides = [1, 1]} : vector<8x128xf32> to vector<8x32xf32>
    %60 = vector.extract_strided_slice %57 {offsets = [0, 32], sizes = [8, 32], strides = [1, 1]} : vector<8x128xf32> to vector<8x32xf32>
    %61 = vector.extract_strided_slice %57 {offsets = [0, 64], sizes = [8, 32], strides = [1, 1]} : vector<8x128xf32> to vector<8x32xf32>
    %62 = vector.extract_strided_slice %58 {offsets = [0, 96], sizes = [8, 32], strides = [1, 1]} : vector<8x128xf32> to vector<8x32xf32>
    %63 = arith.mulf %60, %46 : vector<8x32xf32>
    %64 = arith.mulf %59, %62 : vector<8x32xf32>
    %65 = arith.addf %63, %64 : vector<8x32xf32>
    %66 = math.tanh %65 : vector<8x32xf32>
    %67 = arith.mulf %61, %66 : vector<8x32xf32>
    %68 = vector.extract_strided_slice %7 {offsets = [3, 0, 0], sizes = [1, 8, 128], strides = [1, 1, 1]} : vector<8x8x128xf32> to vector<1x8x128xf32>
    %69 = vector.shape_cast %68 : vector<1x8x128xf32> to vector<8x128xf32>
    %cst_16 = arith.constant dense<0.000000e+00> : vector<8x128xf32>
    %70 = tpu.matmul %67, %8, %cst_16 {dimension_numbers = #tpu.dot_dimension_numbers<[1], [0], [0], [1], [0, 0, 1, 1], [], []>} : vector<8x32xf32>, vector<32x128xf32>, vector<8x128xf32> -> vector<8x128xf32>
    %71 = arith.addf %69, %70 : vector<8x128xf32>
    %72 = arith.negf %71 : vector<8x128xf32>
    %73 = math.exp %72 : vector<8x128xf32>
    %cst_17 = arith.constant 1.000000e+00 : f32
    %74 = vector.broadcast %cst_17 : f32 to vector<8x128xf32>
    %75 = arith.addf %74, %73 : vector<8x128xf32>
    %76 = arith.divf %74, %75 : vector<8x128xf32>
    %77 = math.tanh %71 : vector<8x128xf32>
    %78 = vector.extract_strided_slice %76 {offsets = [0, 0], sizes = [8, 32], strides = [1, 1]} : vector<8x128xf32> to vector<8x32xf32>
    %79 = vector.extract_strided_slice %76 {offsets = [0, 32], sizes = [8, 32], strides = [1, 1]} : vector<8x128xf32> to vector<8x32xf32>
    %80 = vector.extract_strided_slice %76 {offsets = [0, 64], sizes = [8, 32], strides = [1, 1]} : vector<8x128xf32> to vector<8x32xf32>
    %81 = vector.extract_strided_slice %77 {offsets = [0, 96], sizes = [8, 32], strides = [1, 1]} : vector<8x128xf32> to vector<8x32xf32>
    %82 = arith.mulf %79, %65 : vector<8x32xf32>
    %83 = arith.mulf %78, %81 : vector<8x32xf32>
    %84 = arith.addf %82, %83 : vector<8x32xf32>
    %85 = math.tanh %84 : vector<8x32xf32>
    %86 = arith.mulf %80, %85 : vector<8x32xf32>
    %87 = vector.extract_strided_slice %7 {offsets = [4, 0, 0], sizes = [1, 8, 128], strides = [1, 1, 1]} : vector<8x8x128xf32> to vector<1x8x128xf32>
    %88 = vector.shape_cast %87 : vector<1x8x128xf32> to vector<8x128xf32>
    %cst_18 = arith.constant dense<0.000000e+00> : vector<8x128xf32>
    %89 = tpu.matmul %86, %8, %cst_18 {dimension_numbers = #tpu.dot_dimension_numbers<[1], [0], [0], [1], [0, 0, 1, 1], [], []>} : vector<8x32xf32>, vector<32x128xf32>, vector<8x128xf32> -> vector<8x128xf32>
    %90 = arith.addf %88, %89 : vector<8x128xf32>
    %91 = arith.negf %90 : vector<8x128xf32>
    %92 = math.exp %91 : vector<8x128xf32>
    %cst_19 = arith.constant 1.000000e+00 : f32
    %93 = vector.broadcast %cst_19 : f32 to vector<8x128xf32>
    %94 = arith.addf %93, %92 : vector<8x128xf32>
    %95 = arith.divf %93, %94 : vector<8x128xf32>
    %96 = math.tanh %90 : vector<8x128xf32>
    %97 = vector.extract_strided_slice %95 {offsets = [0, 0], sizes = [8, 32], strides = [1, 1]} : vector<8x128xf32> to vector<8x32xf32>
    %98 = vector.extract_strided_slice %95 {offsets = [0, 32], sizes = [8, 32], strides = [1, 1]} : vector<8x128xf32> to vector<8x32xf32>
    %99 = vector.extract_strided_slice %95 {offsets = [0, 64], sizes = [8, 32], strides = [1, 1]} : vector<8x128xf32> to vector<8x32xf32>
    %100 = vector.extract_strided_slice %96 {offsets = [0, 96], sizes = [8, 32], strides = [1, 1]} : vector<8x128xf32> to vector<8x32xf32>
    %101 = arith.mulf %98, %84 : vector<8x32xf32>
    %102 = arith.mulf %97, %100 : vector<8x32xf32>
    %103 = arith.addf %101, %102 : vector<8x32xf32>
    %104 = math.tanh %103 : vector<8x32xf32>
    %105 = arith.mulf %99, %104 : vector<8x32xf32>
    %106 = vector.extract_strided_slice %7 {offsets = [5, 0, 0], sizes = [1, 8, 128], strides = [1, 1, 1]} : vector<8x8x128xf32> to vector<1x8x128xf32>
    %107 = vector.shape_cast %106 : vector<1x8x128xf32> to vector<8x128xf32>
    %cst_20 = arith.constant dense<0.000000e+00> : vector<8x128xf32>
    %108 = tpu.matmul %105, %8, %cst_20 {dimension_numbers = #tpu.dot_dimension_numbers<[1], [0], [0], [1], [0, 0, 1, 1], [], []>} : vector<8x32xf32>, vector<32x128xf32>, vector<8x128xf32> -> vector<8x128xf32>
    %109 = arith.addf %107, %108 : vector<8x128xf32>
    %110 = arith.negf %109 : vector<8x128xf32>
    %111 = math.exp %110 : vector<8x128xf32>
    %cst_21 = arith.constant 1.000000e+00 : f32
    %112 = vector.broadcast %cst_21 : f32 to vector<8x128xf32>
    %113 = arith.addf %112, %111 : vector<8x128xf32>
    %114 = arith.divf %112, %113 : vector<8x128xf32>
    %115 = math.tanh %109 : vector<8x128xf32>
    %116 = vector.extract_strided_slice %114 {offsets = [0, 0], sizes = [8, 32], strides = [1, 1]} : vector<8x128xf32> to vector<8x32xf32>
    %117 = vector.extract_strided_slice %114 {offsets = [0, 32], sizes = [8, 32], strides = [1, 1]} : vector<8x128xf32> to vector<8x32xf32>
    %118 = vector.extract_strided_slice %114 {offsets = [0, 64], sizes = [8, 32], strides = [1, 1]} : vector<8x128xf32> to vector<8x32xf32>
    %119 = vector.extract_strided_slice %115 {offsets = [0, 96], sizes = [8, 32], strides = [1, 1]} : vector<8x128xf32> to vector<8x32xf32>
    %120 = arith.mulf %117, %103 : vector<8x32xf32>
    %121 = arith.mulf %116, %119 : vector<8x32xf32>
    %122 = arith.addf %120, %121 : vector<8x32xf32>
    %123 = math.tanh %122 : vector<8x32xf32>
    %124 = arith.mulf %118, %123 : vector<8x32xf32>
    %125 = vector.extract_strided_slice %7 {offsets = [6, 0, 0], sizes = [1, 8, 128], strides = [1, 1, 1]} : vector<8x8x128xf32> to vector<1x8x128xf32>
    %126 = vector.shape_cast %125 : vector<1x8x128xf32> to vector<8x128xf32>
    %cst_22 = arith.constant dense<0.000000e+00> : vector<8x128xf32>
    %127 = tpu.matmul %124, %8, %cst_22 {dimension_numbers = #tpu.dot_dimension_numbers<[1], [0], [0], [1], [0, 0, 1, 1], [], []>} : vector<8x32xf32>, vector<32x128xf32>, vector<8x128xf32> -> vector<8x128xf32>
    %128 = arith.addf %126, %127 : vector<8x128xf32>
    %129 = arith.negf %128 : vector<8x128xf32>
    %130 = math.exp %129 : vector<8x128xf32>
    %cst_23 = arith.constant 1.000000e+00 : f32
    %131 = vector.broadcast %cst_23 : f32 to vector<8x128xf32>
    %132 = arith.addf %131, %130 : vector<8x128xf32>
    %133 = arith.divf %131, %132 : vector<8x128xf32>
    %134 = math.tanh %128 : vector<8x128xf32>
    %135 = vector.extract_strided_slice %133 {offsets = [0, 0], sizes = [8, 32], strides = [1, 1]} : vector<8x128xf32> to vector<8x32xf32>
    %136 = vector.extract_strided_slice %133 {offsets = [0, 32], sizes = [8, 32], strides = [1, 1]} : vector<8x128xf32> to vector<8x32xf32>
    %137 = vector.extract_strided_slice %133 {offsets = [0, 64], sizes = [8, 32], strides = [1, 1]} : vector<8x128xf32> to vector<8x32xf32>
    %138 = vector.extract_strided_slice %134 {offsets = [0, 96], sizes = [8, 32], strides = [1, 1]} : vector<8x128xf32> to vector<8x32xf32>
    %139 = arith.mulf %136, %122 : vector<8x32xf32>
    %140 = arith.mulf %135, %138 : vector<8x32xf32>
    %141 = arith.addf %139, %140 : vector<8x32xf32>
    %142 = math.tanh %141 : vector<8x32xf32>
    %143 = arith.mulf %137, %142 : vector<8x32xf32>
    %144 = vector.extract_strided_slice %7 {offsets = [7, 0, 0], sizes = [1, 8, 128], strides = [1, 1, 1]} : vector<8x8x128xf32> to vector<1x8x128xf32>
    %145 = vector.shape_cast %144 : vector<1x8x128xf32> to vector<8x128xf32>
    %cst_24 = arith.constant dense<0.000000e+00> : vector<8x128xf32>
    %146 = tpu.matmul %143, %8, %cst_24 {dimension_numbers = #tpu.dot_dimension_numbers<[1], [0], [0], [1], [0, 0, 1, 1], [], []>} : vector<8x32xf32>, vector<32x128xf32>, vector<8x128xf32> -> vector<8x128xf32>
    %147 = arith.addf %145, %146 : vector<8x128xf32>
    %148 = arith.negf %147 : vector<8x128xf32>
    %149 = math.exp %148 : vector<8x128xf32>
    %cst_25 = arith.constant 1.000000e+00 : f32
    %150 = vector.broadcast %cst_25 : f32 to vector<8x128xf32>
    %151 = arith.addf %150, %149 : vector<8x128xf32>
    %152 = arith.divf %150, %151 : vector<8x128xf32>
    %153 = math.tanh %147 : vector<8x128xf32>
    %154 = vector.extract_strided_slice %152 {offsets = [0, 0], sizes = [8, 32], strides = [1, 1]} : vector<8x128xf32> to vector<8x32xf32>
    %155 = vector.extract_strided_slice %152 {offsets = [0, 32], sizes = [8, 32], strides = [1, 1]} : vector<8x128xf32> to vector<8x32xf32>
    %156 = vector.extract_strided_slice %152 {offsets = [0, 64], sizes = [8, 32], strides = [1, 1]} : vector<8x128xf32> to vector<8x32xf32>
    %157 = vector.extract_strided_slice %153 {offsets = [0, 96], sizes = [8, 32], strides = [1, 1]} : vector<8x128xf32> to vector<8x32xf32>
    %158 = arith.mulf %155, %141 : vector<8x32xf32>
    %159 = arith.mulf %154, %157 : vector<8x32xf32>
    %160 = arith.addf %158, %159 : vector<8x32xf32>
    %161 = math.tanh %160 : vector<8x32xf32>
    %162 = arith.mulf %156, %161 : vector<8x32xf32>
    %c0_26 = arith.constant 0 : index
    %c0_27 = arith.constant 0 : index
    %163 = vector.load %arg4[%c0_26, %c0_27] : memref<32x32xf32, #tpu.memory_space<vmem>>, vector<32x32xf32>
    %cst_28 = arith.constant dense<0.000000e+00> : vector<8x32xf32>
    %164 = tpu.matmul %162, %163, %cst_28 {dimension_numbers = #tpu.dot_dimension_numbers<[1], [0], [0], [1], [0, 0, 1, 1], [], []>} : vector<8x32xf32>, vector<32x32xf32>, vector<8x32xf32> -> vector<8x32xf32>
    %c0_29 = arith.constant 0 : index
    %c0_30 = arith.constant 0 : index
    %165 = vector.load %arg5[%c0_29, %c0_30] : memref<1x32xf32, #tpu.memory_space<vmem>>, vector<1x32xf32>
    %166 = vector.broadcast %165 : vector<1x32xf32> to vector<8x32xf32>
    %167 = arith.addf %164, %166 : vector<8x32xf32>
    %c0_31 = arith.constant 0 : index
    %c0_32 = arith.constant 0 : index
    %168 = vector.load %arg6[%c0_31, %c0_32] : memref<8x32xf32, #tpu.memory_space<vmem>>, vector<8x32xf32>
    tpu.vector_store %arg6[%c0_31, %c0_32], %167 {strides = array<i32>} : memref<8x32xf32, #tpu.memory_space<vmem>>, vector<8x32xf32>,
    %c0_33 = arith.constant 0 : index
    %c0_34 = arith.constant 0 : index
    %169 = vector.load %arg7[%c0_33, %c0_34] : memref<8x32xf32, #tpu.memory_space<vmem>>, vector<8x32xf32>
    tpu.vector_store %arg7[%c0_33, %c0_34], %162 {strides = array<i32>} : memref<8x32xf32, #tpu.memory_space<vmem>>, vector<8x32xf32>,
    %c0_35 = arith.constant 0 : index
    %c0_36 = arith.constant 0 : index
    %170 = vector.load %arg8[%c0_35, %c0_36] : memref<8x32xf32, #tpu.memory_space<vmem>>, vector<8x32xf32>
    tpu.vector_store %arg8[%c0_35, %c0_36], %160 {strides = array<i32>} : memref<8x32xf32, #tpu.memory_space<vmem>>, vector<8x32xf32>,
    return
  }
}

</mosaic_0001>

<llo_original>
// kernel: lstm_forward.1
$region0: #{lstm_forward.1}
  #allocation0 [shape = 'u32[]', space=smem, size = 0x4, offset = 0x4, fixed_abs, tag = 'smem constant byte address 0x4 - core index']
  #allocation1 [shape = 'u32[72,128]{1,0:T(1,128)}', space=vmem, size = 0x9000, scoped, tag = 'internal scratch']
  %s0 = inlined_call_operand.vmem [shape: f32[8,8,13], index: 0, kind: input, shape index: {}]
  %s1 = inlined_call_operand.vmem [shape: f32[13,128], index: 1, kind: input, shape index: {}]
  %s2 = inlined_call_operand.vmem [shape: f32[32,128], index: 2, kind: input, shape index: {}]
  %s3 = inlined_call_operand.vmem [shape: f32[1,128], index: 3, kind: input, shape index: {}]
  %s4 = inlined_call_operand.vmem [shape: f32[32,32], index: 4, kind: input, shape index: {}]
  %s5 = inlined_call_operand.vmem [shape: f32[1,32], index: 5, kind: input, shape index: {}]
  %s6 = inlined_call_operand.vmem [shape: f32[8,32], index: 6, kind: output, shape index: {0}]
  %s7 = inlined_call_operand.vmem [shape: f32[8,32], index: 7, kind: output, shape index: {1}]
  %s8 = inlined_call_operand.vmem [shape: f32[8,32], index: 8, kind: output, shape index: {2}]
  %9 = xla_tuple %s6, %s7, %s8
  %s10 = sld [smem:[#allocation0]]
  $region50: #{lstm_forward.1} parent=0
    _
  %s12 = ssub.s32 1, %s10
  %s13 = scalar_select 0, %s12, %s10
  // Predicated region
  $region2: #{lstm_forward.1} parent=0 // pred_check
    _
  $region3: #{lstm_forward.1} parent=0 // pred_check_branch
    %15 = sbr.rel (0) target = $region5
  $region4: #{lstm_forward.1} parent=0 // pred_region
    _
  $region5: #{lstm_forward.1} parent=0 // pred_fallthru
    _
  // Predicated region
  $region6: #{lstm_forward.1} parent=0 // pred_check
    _
  $region7: #{lstm_forward.1} parent=0 // pred_check_branch
    %17 = sbr.rel (0) target = $region9
  $region8: #{lstm_forward.1} parent=0 // pred_region
    _
  $region9: #{lstm_forward.1} parent=0 // pred_fallthru
    _
  // Predicated region
  $region10: #{lstm_forward.1} parent=0 // pred_check
    _
  $region11: #{lstm_forward.1} parent=0 // pred_check_branch
    %19 = sbr.rel (0) target = $region13
  $region12: #{lstm_forward.1} parent=0 // pred_region
    _
  $region13: #{lstm_forward.1} parent=0 // pred_fallthru
    _
  // Predicated region
  $region14: #{lstm_forward.1} parent=0 // pred_check
    _
  $region15: #{lstm_forward.1} parent=0 // pred_check_branch
    %21 = sbr.rel (0) target = $region17
  $region16: #{lstm_forward.1} parent=0 // pred_region
    _
  $region17: #{lstm_forward.1} parent=0 // pred_fallthru
    _
  // Predicated region
  $region18: #{lstm_forward.1} parent=0 // pred_check
    _
  $region19: #{lstm_forward.1} parent=0 // pred_check_branch
    %23 = sbr.rel (0) target = $region21
  $region20: #{lstm_forward.1} parent=0 // pred_region
    _
  $region21: #{lstm_forward.1} parent=0 // pred_fallthru
    _
  // Predicated region
  $region22: #{lstm_forward.1} parent=0 // pred_check
    _
  $region23: #{lstm_forward.1} parent=0 // pred_check_branch
    %25 = sbr.rel (0) target = $region25
  $region24: #{lstm_forward.1} parent=0 // pred_region
    _
  $region25: #{lstm_forward.1} parent=0 // pred_fallthru
    _
  %v26 = vld [vmem:[%s0] sm:$0xff]
  %v27 = vld [vmem:[%s0 + $0x8] sm:$0xff]
  %v28 = vld [vmem:[%s0 + $0x10] sm:$0xff]
  %v29 = vld [vmem:[%s0 + $0x18] sm:$0xff]
  %v30 = vld [vmem:[%s0 + $0x20] sm:$0xff]
  %v31 = vld [vmem:[%s0 + $0x28] sm:$0xff]
  %v32 = vld [vmem:[%s0 + $0x30] sm:$0xff]
  %v33 = vld [vmem:[%s0 + $0x38] sm:$0xff]
  %v34 = vld [vmem:[%s1] sm:$0xff]
  %v35 = vld [vmem:[%s1 + $0x8] sm:$0x1f]
  %v36 = vld [vmem:[%s3] sm:$0x1]
  %v38 = vperm.slane %v36, 0
  %vm40 = vcmask 105472
  %v42 = vsel %vm40, %v26, 0
  %v45 = vsel %vm40, %v27, 0
  %v48 = vsel %vm40, %v28, 0
  %v51 = vsel %vm40, %v29, 0
  %v54 = vsel %vm40, %v30, 0
  %v57 = vsel %vm40, %v31, 0
  %v60 = vsel %vm40, %v32, 0
  %v63 = vsel %vm40, %v33, 0
  %vm65 = vcmask 1044480
  %v67 = vsel %vm65, %v35, 0
  %69 = vmatpush.msra.mxu0 0.0
  %70 = vmatpush.msra.mxu0 0.0
  %71 = vmatpush.msra.mxu0 0.0
  %72 = vmatpush.msra.mxu0 0.0
  %73 = vmatpush.msra.mxu0 0.0
  %74 = vmatpush.msra.mxu0 0.0
  %75 = vmatpush.msra.mxu0 0.0
  %76 = vmatpush.msra.mxu0 0.0
  %77 = vmatpush.msra.mxu0 0.0
  %78 = vmatpush.msra.mxu0 0.0
  %79 = vmatpush.msra.mxu0 0.0
  %80 = vmatpush.msra.mxu0 0.0
  %81 = vmatpush.msra.mxu0 0.0
  %82 = vmatpush.msra.mxu0 0.0
  %83 = vmatpush.msra.mxu0 %v67
  %84 = vmatpush.msra.mxu0 %v34
  %85 = vmatmul.f32.gmra.mxu0 %v42
  %v86 = vpop.f32.mrf.mxu0
  %v87 = vadd.f32 %v38, %v86
  %88 = vmatmul.f32.gmra.mxu0 %v45
  %v89 = vpop.f32.mrf.mxu0
  %v90 = vadd.f32 %v38, %v89
  %91 = vmatmul.f32.gmra.mxu0 %v48
  %v92 = vpop.f32.mrf.mxu0
  %v93 = vadd.f32 %v38, %v92
  %94 = vmatmul.f32.gmra.mxu0 %v51
  %v95 = vpop.f32.mrf.mxu0
  %v96 = vadd.f32 %v38, %v95
  %97 = vmatmul.f32.gmra.mxu0 %v54
  %v98 = vpop.f32.mrf.mxu0
  %v99 = vadd.f32 %v38, %v98
  %100 = vmatmul.f32.gmra.mxu0 %v57
  %v101 = vpop.f32.mrf.mxu0
  %v102 = vadd.f32 %v38, %v101
  %103 = vmatmul.f32.gmra.mxu0 %v60
  %v104 = vpop.f32.mrf.mxu0
  %v105 = vadd.f32 %v38, %v104
  %106 = vmatmul.f32.gmra.mxu0 %v63
  %v107 = vpop.f32.mrf.mxu0
  %v108 = vadd.f32 %v38, %v107
  %109 = vdwg.mxu0
  %v110 = vld [vmem:[%s2] sm:$0xff]
  %v111 = vld [vmem:[%s2 + $0x8] sm:$0xff]
  %v112 = vld [vmem:[%s2 + $0x10] sm:$0xff]
  %v113 = vld [vmem:[%s2 + $0x18] sm:$0xff]
  %vm114 = vcmask 261120
  %v116 = vsel %vm114, 0.0, 0
  %118 = vmatpush.msra.mxu0 0.0
  %119 = vmatpush.msra.mxu0 0.0
  %120 = vmatpush.msra.mxu0 0.0
  %121 = vmatpush.msra.mxu0 0.0
  %122 = vmatpush.msra.mxu0 0.0
  %123 = vmatpush.msra.mxu0 0.0
  %124 = vmatpush.msra.mxu0 0.0
  %125 = vmatpush.msra.mxu0 0.0
  %126 = vmatpush.msra.mxu0 0.0
  %127 = vmatpush.msra.mxu0 0.0
  %128 = vmatpush.msra.mxu0 0.0
  %129 = vmatpush.msra.mxu0 0.0
  %130 = vmatpush.msra.mxu0 %v113
  %131 = vmatpush.msra.mxu0 %v112
  %132 = vmatpush.msra.mxu0 %v111
  %133 = vmatpush.msra.mxu0 %v110
  %134 = vmatmul.f32.gmra.mxu0 %v116
  %v135 = vpop.f32.mrf.mxu0
  %v136 = vadd.f32 0.0, %v135
  %137 = vdwg.mxu0
  %v138 = vadd.f32 %v87, %v136
  %v139 = vxor.u32 %v138, 2147483648
  %v140 = vmul.f32 %v139, 1.442695
  %v141 = vpow.pop %v140
  %v142 = vadd.f32 %v141, 1.0
  %v143 = vrcp.pop %v142
  %v144 = vmul.f32 %v142, %v143
  %v145 = vsub.f32 1.0, %v144
  %v146 = vmul.f32 %v143, %v145
  %v147 = vadd.f32 %v143, %v146
  %vm148 = vweird.f32 %v142
  %vm149 = vweird.f32 %v143
  %vm150 = vmor %vm148, %vm149
  %v151 = vsel %vm150, %v143, %v147
  %v152 = vand.u32 2147483647, %v142
  %vm153 = vcmp.eq.f32.partialorder %v152, 8.507059e+37
  %v154 = vand.u32 %v142, 2147483648
  %v155 = vor.u32 1.1754944e-38, %v154
  %v156 = vsel %vm153, %v155, %v151
  %v157 = vmul.f32 1.0, %v156
  %v158 = vtanh.pop %v138
  %v159 = vmul.f32 %v157, 0.0
  %161 = vrot.lane.b32.xlu0 %v158, 32
  %v162 = vpop.permute.xlu0 %161
  %v164 = vmul.f32 %v157, %v162
  %166 = vrot.lane.b32.xlu0 %v164, 32
  %v167 = vpop.permute.xlu0 %166
  %v169 = vadd.f32 %v159, %v167
  %v170 = vtanh.pop %v169
  %172 = vrot.lane.b32.xlu0 %v170, 32
  %v173 = vpop.permute.xlu0 %172
  %v175 = vmul.f32 %v157, %v173
  %177 = vrot.lane.b32.xlu0 %v175, 64
  %v178 = vpop.permute.xlu0 %177
  %v179 = vsel %vm114, %v178, 0
  %181 = vmatpush.msra.mxu0 0.0
  %182 = vmatpush.msra.mxu0 0.0
  %183 = vmatpush.msra.mxu0 0.0
  %184 = vmatpush.msra.mxu0 0.0
  %185 = vmatpush.msra.mxu0 0.0
  %186 = vmatpush.msra.mxu0 0.0
  %187 = vmatpush.msra.mxu0 0.0
  %188 = vmatpush.msra.mxu0 0.0
  %189 = vmatpush.msra.mxu0 0.0
  %190 = vmatpush.msra.mxu0 0.0
  %191 = vmatpush.msra.mxu0 0.0
  %192 = vmatpush.msra.mxu0 0.0
  %193 = vmatpush.msra.mxu0 %v113
  %194 = vmatpush.msra.mxu0 %v112
  %195 = vmatpush.msra.mxu0 %v111
  %196 = vmatpush.msra.mxu0 %v110
  %197 = vmatmul.f32.gmra.mxu0 %v179
  %v198 = vpop.f32.mrf.mxu0
  %v199 = vadd.f32 0.0, %v198
  %200 = vdwg.mxu0
  %v201 = vadd.f32 %v90, %v199
  %v202 = vxor.u32 %v201, 2147483648
  %v203 = vmul.f32 %v202, 1.442695
  %v204 = vpow.pop %v203
  %v205 = vadd.f32 %v204, 1.0
  %v206 = vrcp.pop %v205
  %v207 = vmul.f32 %v205, %v206
  %v208 = vsub.f32 1.0, %v207
  %v209 = vmul.f32 %v206, %v208
  %v210 = vadd.f32 %v206, %v209
  %vm211 = vweird.f32 %v205
  %vm212 = vweird.f32 %v206
  %vm213 = vmor %vm211, %vm212
  %v214 = vsel %vm213, %v206, %v210
  %v215 = vand.u32 2147483647, %v205
  %vm216 = vcmp.eq.f32.partialorder %v215, 8.507059e+37
  %v217 = vand.u32 %v205, 2147483648
  %v218 = vor.u32 1.1754944e-38, %v217
  %v219 = vsel %vm216, %v218, %v214
  %v220 = vmul.f32 1.0, %v219
  %v221 = vtanh.pop %v201
  %v222 = vmul.f32 %v220, %v169
  %224 = vrot.lane.b32.xlu0 %v221, 32
  %v225 = vpop.permute.xlu0 %224
  %v227 = vmul.f32 %v220, %v225
  %229 = vrot.lane.b32.xlu0 %v227, 32
  %v230 = vpop.permute.xlu0 %229
  %v232 = vadd.f32 %v222, %v230
  %v233 = vtanh.pop %v232
  %235 = vrot.lane.b32.xlu0 %v233, 32
  %v236 = vpop.permute.xlu0 %235
  %v238 = vmul.f32 %v220, %v236
  %240 = vrot.lane.b32.xlu0 %v238, 64
  %v241 = vpop.permute.xlu0 %240
  %v242 = vsel %vm114, %v241, 0
  %244 = vmatpush.msra.mxu0 0.0
  %245 = vmatpush.msra.mxu0 0.0
  %246 = vmatpush.msra.mxu0 0.0
  %247 = vmatpush.msra.mxu0 0.0
  %248 = vmatpush.msra.mxu0 0.0
  %249 = vmatpush.msra.mxu0 0.0
  %250 = vmatpush.msra.mxu0 0.0
  %251 = vmatpush.msra.mxu0 0.0
  %252 = vmatpush.msra.mxu0 0.0
  %253 = vmatpush.msra.mxu0 0.0
  %254 = vmatpush.msra.mxu0 0.0
  %255 = vmatpush.msra.mxu0 0.0
  %256 = vmatpush.msra.mxu0 %v113
  %257 = vmatpush.msra.mxu0 %v112
  %258 = vmatpush.msra.mxu0 %v111
  %259 = vmatpush.msra.mxu0 %v110
  %260 = vmatmul.f32.gmra.mxu0 %v242
  %v261 = vpop.f32.mrf.mxu0
  %v262 = vadd.f32 0.0, %v261
  %263 = vdwg.mxu0
  %v264 = vadd.f32 %v93, %v262
  %v265 = vxor.u32 %v264, 2147483648
  %v266 = vmul.f32 %v265, 1.442695
  %v267 = vpow.pop %v266
  %v268 = vadd.f32 %v267, 1.0
  %v269 = vrcp.pop %v268
  %v270 = vmul.f32 %v268, %v269
  %v271 = vsub.f32 1.0, %v270
  %v272 = vmul.f32 %v269, %v271
  %v273 = vadd.f32 %v269, %v272
  %vm274 = vweird.f32 %v268
  %vm275 = vweird.f32 %v269
  %vm276 = vmor %vm274, %vm275
  %v277 = vsel %vm276, %v269, %v273
  %v278 = vand.u32 2147483647, %v268
  %vm279 = vcmp.eq.f32.partialorder %v278, 8.507059e+37
  %v280 = vand.u32 %v268, 2147483648
  %v281 = vor.u32 1.1754944e-38, %v280
  %v282 = vsel %vm279, %v281, %v277
  %v283 = vmul.f32 1.0, %v282
  %v284 = vtanh.pop %v264
  %v285 = vmul.f32 %v283, %v232
  %287 = vrot.lane.b32.xlu0 %v284, 32
  %v288 = vpop.permute.xlu0 %287
  %v290 = vmul.f32 %v283, %v288
  %292 = vrot.lane.b32.xlu0 %v290, 32
  %v293 = vpop.permute.xlu0 %292
  %v295 = vadd.f32 %v285, %v293
  %v296 = vtanh.pop %v295
  %298 = vrot.lane.b32.xlu0 %v296, 32
  %v299 = vpop.permute.xlu0 %298
  %v301 = vmul.f32 %v283, %v299
  %303 = vrot.lane.b32.xlu0 %v301, 64
  %v304 = vpop.permute.xlu0 %303
  %v305 = vsel %vm114, %v304, 0
  %307 = vmatpush.msra.mxu0 0.0
  %308 = vmatpush.msra.mxu0 0.0
  %309 = vmatpush.msra.mxu0 0.0
  %310 = vmatpush.msra.mxu0 0.0
  %311 = vmatpush.msra.mxu0 0.0
  %312 = vmatpush.msra.mxu0 0.0
  %313 = vmatpush.msra.mxu0 0.0
  %314 = vmatpush.msra.mxu0 0.0
  %315 = vmatpush.msra.mxu0 0.0
  %316 = vmatpush.msra.mxu0 0.0
  %317 = vmatpush.msra.mxu0 0.0
  %318 = vmatpush.msra.mxu0 0.0
  %319 = vmatpush.msra.mxu0 %v113
  %320 = vmatpush.msra.mxu0 %v112
  %321 = vmatpush.msra.mxu0 %v111
  %322 = vmatpush.msra.mxu0 %v110
  %323 = vmatmul.f32.gmra.mxu0 %v305
  %v324 = vpop.f32.mrf.mxu0
  %v325 = vadd.f32 0.0, %v324
  %326 = vdwg.mxu0
  %v327 = vadd.f32 %v96, %v325
  %v328 = vxor.u32 %v327, 2147483648
  %v329 = vmul.f32 %v328, 1.442695
  %v330 = vpow.pop %v329
  %v331 = vadd.f32 %v330, 1.0
  %v332 = vrcp.pop %v331
  %v333 = vmul.f32 %v331, %v332
  %v334 = vsub.f32 1.0, %v333
  %v335 = vmul.f32 %v332, %v334
  %v336 = vadd.f32 %v332, %v335
  %vm337 = vweird.f32 %v331
  %vm338 = vweird.f32 %v332
  %vm339 = vmor %vm337, %vm338
  %v340 = vsel %vm339, %v332, %v336
  %v341 = vand.u32 2147483647, %v331
  %vm342 = vcmp.eq.f32.partialorder %v341, 8.507059e+37
  %v343 = vand.u32 %v331, 2147483648
  %v344 = vor.u32 1.1754944e-38, %v343
  %v345 = vsel %vm342, %v344, %v340
  %v346 = vmul.f32 1.0, %v345
  %v347 = vtanh.pop %v327
  %v348 = vmul.f32 %v346, %v295
  %350 = vrot.lane.b32.xlu0 %v347, 32
  %v351 = vpop.permute.xlu0 %350
  %v353 = vmul.f32 %v346, %v351
  %355 = vrot.lane.b32.xlu0 %v353, 32
  %v356 = vpop.permute.xlu0 %355
  %v358 = vadd.f32 %v348, %v356
  %v359 = vtanh.pop %v358
  %361 = vrot.lane.b32.xlu0 %v359, 32
  %v362 = vpop.permute.xlu0 %361
  %v364 = vmul.f32 %v346, %v362
  %366 = vrot.lane.b32.xlu0 %v364, 64
  %v367 = vpop.permute.xlu0 %366
  %v368 = vsel %vm114, %v367, 0
  %370 = vmatpush.msra.mxu0 0.0
  %371 = vmatpush.msra.mxu0 0.0
  %372 = vmatpush.msra.mxu0 0.0
  %373 = vmatpush.msra.mxu0 0.0
  %374 = vmatpush.msra.mxu0 0.0
  %375 = vmatpush.msra.mxu0 0.0
  %376 = vmatpush.msra.mxu0 0.0
  %377 = vmatpush.msra.mxu0 0.0
  %378 = vmatpush.msra.mxu0 0.0
  %379 = vmatpush.msra.mxu0 0.0
  %380 = vmatpush.msra.mxu0 0.0
  %381 = vmatpush.msra.mxu0 0.0
  %382 = vmatpush.msra.mxu0 %v113
  %383 = vmatpush.msra.mxu0 %v112
  %384 = vmatpush.msra.mxu0 %v111
  %385 = vmatpush.msra.mxu0 %v110
  %386 = vmatmul.f32.gmra.mxu0 %v368
  %v387 = vpop.f32.mrf.mxu0
  %v388 = vadd.f32 0.0, %v387
  %389 = vdwg.mxu0
  %v390 = vadd.f32 %v99, %v388
  %v391 = vxor.u32 %v390, 2147483648
  %v392 = vmul.f32 %v391, 1.442695
  %v393 = vpow.pop %v392
  %v394 = vadd.f32 %v393, 1.0
  %v395 = vrcp.pop %v394
  %v396 = vmul.f32 %v394, %v395
  %v397 = vsub.f32 1.0, %v396
  %v398 = vmul.f32 %v395, %v397
  %v399 = vadd.f32 %v395, %v398
  %vm400 = vweird.f32 %v394
  %vm401 = vweird.f32 %v395
  %vm402 = vmor %vm400, %vm401
  %v403 = vsel %vm402, %v395, %v399
  %v404 = vand.u32 2147483647, %v394
  %vm405 = vcmp.eq.f32.partialorder %v404, 8.507059e+37
  %v406 = vand.u32 %v394, 2147483648
  %v407 = vor.u32 1.1754944e-38, %v406
  %v408 = vsel %vm405, %v407, %v403
  %v409 = vmul.f32 1.0, %v408
  %v410 = vtanh.pop %v390
  %v411 = vmul.f32 %v409, %v358
  %413 = vrot.lane.b32.xlu0 %v410, 32
  %v414 = vpop.permute.xlu0 %413
  %v416 = vmul.f32 %v409, %v414
  %418 = vrot.lane.b32.xlu0 %v416, 32
  %v419 = vpop.permute.xlu0 %418
  %v421 = vadd.f32 %v411, %v419
  %v422 = vtanh.pop %v421
  %424 = vrot.lane.b32.xlu0 %v422, 32
  %v425 = vpop.permute.xlu0 %424
  %v427 = vmul.f32 %v409, %v425
  %429 = vrot.lane.b32.xlu0 %v427, 64
  %v430 = vpop.permute.xlu0 %429
  %v431 = vsel %vm114, %v430, 0
  %433 = vmatpush.msra.mxu0 0.0
  %434 = vmatpush.msra.mxu0 0.0
  %435 = vmatpush.msra.mxu0 0.0
  %436 = vmatpush.msra.mxu0 0.0
  %437 = vmatpush.msra.mxu0 0.0
  %438 = vmatpush.msra.mxu0 0.0
  %439 = vmatpush.msra.mxu0 0.0
  %440 = vmatpush.msra.mxu0 0.0
  %441 = vmatpush.msra.mxu0 0.0
  %442 = vmatpush.msra.mxu0 0.0
  %443 = vmatpush.msra.mxu0 0.0
  %444 = vmatpush.msra.mxu0 0.0
  %445 = vmatpush.msra.mxu0 %v113
  %446 = vmatpush.msra.mxu0 %v112
  %447 = vmatpush.msra.mxu0 %v111
  %448 = vmatpush.msra.mxu0 %v110
  %449 = vmatmul.f32.gmra.mxu0 %v431
  %v450 = vpop.f32.mrf.mxu0
  %v451 = vadd.f32 0.0, %v450
  %452 = vdwg.mxu0
  %v453 = vadd.f32 %v102, %v451
  %v454 = vxor.u32 %v453, 2147483648
  %v455 = vmul.f32 %v454, 1.442695
  %v456 = vpow.pop %v455
  %v457 = vadd.f32 %v456, 1.0
  %v458 = vrcp.pop %v457
  %v459 = vmul.f32 %v457, %v458
  %v460 = vsub.f32 1.0, %v459
  %v461 = vmul.f32 %v458, %v460
  %v462 = vadd.f32 %v458, %v461
  %vm463 = vweird.f32 %v457
  %vm464 = vweird.f32 %v458
  %vm465 = vmor %vm463, %vm464
  %v466 = vsel %vm465, %v458, %v462
  %v467 = vand.u32 2147483647, %v457
  %vm468 = vcmp.eq.f32.partialorder %v467, 8.507059e+37
  %v469 = vand.u32 %v457, 2147483648
  %v470 = vor.u32 1.1754944e-38, %v469
  %v471 = vsel %vm468, %v470, %v466
  %v472 = vmul.f32 1.0, %v471
  %v473 = vtanh.pop %v453
  %v474 = vmul.f32 %v472, %v421
  %476 = vrot.lane.b32.xlu0 %v473, 32
  %v477 = vpop.permute.xlu0 %476
  %v479 = vmul.f32 %v472, %v477
  %481 = vrot.lane.b32.xlu0 %v479, 32
  %v482 = vpop.permute.xlu0 %481
  %v484 = vadd.f32 %v474, %v482
  %v485 = vtanh.pop %v484
  %487 = vrot.lane.b32.xlu0 %v485, 32
  %v488 = vpop.permute.xlu0 %487
  %v490 = vmul.f32 %v472, %v488
  %492 = vrot.lane.b32.xlu0 %v490, 64
  %v493 = vpop.permute.xlu0 %492
  %v494 = vsel %vm114, %v493, 0
  %496 = vmatpush.msra.mxu0 0.0
  %497 = vmatpush.msra.mxu0 0.0
  %498 = vmatpush.msra.mxu0 0.0
  %499 = vmatpush.msra.mxu0 0.0
  %500 = vmatpush.msra.mxu0 0.0
  %501 = vmatpush.msra.mxu0 0.0
  %502 = vmatpush.msra.mxu0 0.0
  %503 = vmatpush.msra.mxu0 0.0
  %504 = vmatpush.msra.mxu0 0.0
  %505 = vmatpush.msra.mxu0 0.0
  %506 = vmatpush.msra.mxu0 0.0
  %507 = vmatpush.msra.mxu0 0.0
  %508 = vmatpush.msra.mxu0 %v113
  %509 = vmatpush.msra.mxu0 %v112
  %510 = vmatpush.msra.mxu0 %v111
  %511 = vmatpush.msra.mxu0 %v110
  %512 = vmatmul.f32.gmra.mxu0 %v494
  %v513 = vpop.f32.mrf.mxu0
  %v514 = vadd.f32 0.0, %v513
  %515 = vdwg.mxu0
  %v516 = vadd.f32 %v105, %v514
  %v517 = vxor.u32 %v516, 2147483648
  %v518 = vmul.f32 %v517, 1.442695
  %v519 = vpow.pop %v518
  %v520 = vadd.f32 %v519, 1.0
  %v521 = vrcp.pop %v520
  %v522 = vmul.f32 %v520, %v521
  %v523 = vsub.f32 1.0, %v522
  %v524 = vmul.f32 %v521, %v523
  %v525 = vadd.f32 %v521, %v524
  %vm526 = vweird.f32 %v520
  %vm527 = vweird.f32 %v521
  %vm528 = vmor %vm526, %vm527
  %v529 = vsel %vm528, %v521, %v525
  %v530 = vand.u32 2147483647, %v520
  %vm531 = vcmp.eq.f32.partialorder %v530, 8.507059e+37
  %v532 = vand.u32 %v520, 2147483648
  %v533 = vor.u32 1.1754944e-38, %v532
  %v534 = vsel %vm531, %v533, %v529
  %v535 = vmul.f32 1.0, %v534
  %v536 = vtanh.pop %v516
  %v537 = vmul.f32 %v535, %v484
  %539 = vrot.lane.b32.xlu0 %v536, 32
  %v540 = vpop.permute.xlu0 %539
  %v542 = vmul.f32 %v535, %v540
  %544 = vrot.lane.b32.xlu0 %v542, 32
  %v545 = vpop.permute.xlu0 %544
  %v547 = vadd.f32 %v537, %v545
  %v548 = vtanh.pop %v547
  %550 = vrot.lane.b32.xlu0 %v548, 32
  %v551 = vpop.permute.xlu0 %550
  %v553 = vmul.f32 %v535, %v551
  %555 = vrot.lane.b32.xlu0 %v553, 64
  %v556 = vpop.permute.xlu0 %555
  %v557 = vsel %vm114, %v556, 0
  %559 = vmatpush.msra.mxu0 0.0
  %560 = vmatpush.msra.mxu0 0.0
  %561 = vmatpush.msra.mxu0 0.0
  %562 = vmatpush.msra.mxu0 0.0
  %563 = vmatpush.msra.mxu0 0.0
  %564 = vmatpush.msra.mxu0 0.0
  %565 = vmatpush.msra.mxu0 0.0
  %566 = vmatpush.msra.mxu0 0.0
  %567 = vmatpush.msra.mxu0 0.0
  %568 = vmatpush.msra.mxu0 0.0
  %569 = vmatpush.msra.mxu0 0.0
  %570 = vmatpush.msra.mxu0 0.0
  %571 = vmatpush.msra.mxu0 %v113
  %572 = vmatpush.msra.mxu0 %v112
  %573 = vmatpush.msra.mxu0 %v111
  %574 = vmatpush.msra.mxu0 %v110
  %575 = vmatmul.f32.gmra.mxu0 %v557
  %v576 = vpop.f32.mrf.mxu0
  %v577 = vadd.f32 0.0, %v576
  %578 = vdwg.mxu0
  %v579 = vadd.f32 %v108, %v577
  %v580 = vxor.u32 %v579, 2147483648
  %v581 = vmul.f32 %v580, 1.442695
  %v582 = vpow.pop %v581
  %v583 = vadd.f32 %v582, 1.0
  %v584 = vrcp.pop %v583
  %v585 = vmul.f32 %v583, %v584
  %v586 = vsub.f32 1.0, %v585
  %v587 = vmul.f32 %v584, %v586
  %v588 = vadd.f32 %v584, %v587
  %vm589 = vweird.f32 %v583
  %vm590 = vweird.f32 %v584
  %vm591 = vmor %vm589, %vm590
  %v592 = vsel %vm591, %v584, %v588
  %v593 = vand.u32 2147483647, %v583
  %vm594 = vcmp.eq.f32.partialorder %v593, 8.507059e+37
  %v595 = vand.u32 %v583, 2147483648
  %v596 = vor.u32 1.1754944e-38, %v595
  %v597 = vsel %vm594, %v596, %v592
  %v598 = vmul.f32 1.0, %v597
  %v599 = vtanh.pop %v579
  %v600 = vmul.f32 %v598, %v547
  %602 = vrot.lane.b32.xlu0 %v599, 32
  %v603 = vpop.permute.xlu0 %602
  %v605 = vmul.f32 %v598, %v603
  %607 = vrot.lane.b32.xlu0 %v605, 32
  %v608 = vpop.permute.xlu0 %607
  %v610 = vadd.f32 %v600, %v608
  %v611 = vtanh.pop %v610
  %613 = vrot.lane.b32.xlu0 %v611, 32
  %v614 = vpop.permute.xlu0 %613
  %v616 = vmul.f32 %v598, %v614
  %v617 = vld [vmem:[%s4] sm:$0xff]
  %v618 = vld [vmem:[%s4 + $0x8] sm:$0xff]
  %v619 = vld [vmem:[%s4 + $0x10] sm:$0xff]
  %v620 = vld [vmem:[%s4 + $0x18] sm:$0xff]
  %v621 = vld [vmem:[%s5] sm:$0x1]
  %v623 = vperm.slane %v621, 0
  %626 = vrot.lane.b32.xlu0 %v616, 64
  %v627 = vpop.permute.xlu0 %626
  %v628 = vsel %vm114, %v627, 0
  %630 = vmatpush.msra.mxu0 0.0
  %631 = vmatpush.msra.mxu0 0.0
  %632 = vmatpush.msra.mxu0 0.0
  %633 = vmatpush.msra.mxu0 0.0
  %634 = vmatpush.msra.mxu0 0.0
  %635 = vmatpush.msra.mxu0 0.0
  %636 = vmatpush.msra.mxu0 0.0
  %637 = vmatpush.msra.mxu0 0.0
  %638 = vmatpush.msra.mxu0 0.0
  %639 = vmatpush.msra.mxu0 0.0
  %640 = vmatpush.msra.mxu0 0.0
  %641 = vmatpush.msra.mxu0 0.0
  %642 = vmatpush.msra.mxu0 %v620
  %643 = vmatpush.msra.mxu0 %v619
  %644 = vmatpush.msra.mxu0 %v618
  %645 = vmatpush.msra.mxu0 %v617
  %646 = vmatmul.f32.gmra.mxu0 %v628
  %v647 = vpop.f32.mrf.mxu0
  %v648 = vadd.f32 %v623, %v647
  %649 = vdwg.mxu0
  %650 = vst.msk [vmem:[%s6] sm:$0xff] %vm114, %v648
  %652 = vst.msk [vmem:[%s7] sm:$0xff] %vm114, %v627
  %654 = vrot.lane.b32.xlu0 %v610, 96
  %v655 = vpop.permute.xlu0 %654
  %657 = vst.msk [vmem:[%s8] sm:$0xff] %vm114, %v655
  // Predicated region
  $region26: #{lstm_forward.1} parent=0 // pred_check
    _
  $region27: #{lstm_forward.1} parent=0 // pred_check_branch
    %659 = sbr.rel (0) target = $region29
  $region28: #{lstm_forward.1} parent=0 // pred_region
    _
  $region29: #{lstm_forward.1} parent=0 // pred_fallthru
    _
  // Predicated region
  $region30: #{lstm_forward.1} parent=0 // pred_check
    _
  $region31: #{lstm_forward.1} parent=0 // pred_check_branch
    %661 = sbr.rel (0) target = $region33
  $region32: #{lstm_forward.1} parent=0 // pred_region
    _
  $region33: #{lstm_forward.1} parent=0 // pred_fallthru
    _
  // Predicated region
  $region34: #{lstm_forward.1} parent=0 // pred_check
    _
  $region35: #{lstm_forward.1} parent=0 // pred_check_branch
    %663 = sbr.rel (0) target = $region37
  $region36: #{lstm_forward.1} parent=0 // pred_region
    _
  $region37: #{lstm_forward.1} parent=0 // pred_fallthru
    _
  // Predicated region
  $region38: #{lstm_forward.1} parent=0 // pred_check
    _
  $region39: #{lstm_forward.1} parent=0 // pred_check_branch
    %665 = sbr.rel (0) target = $region41
  $region40: #{lstm_forward.1} parent=0 // pred_region
    _
  $region41: #{lstm_forward.1} parent=0 // pred_fallthru
    _
  // Predicated region
  $region42: #{lstm_forward.1} parent=0 // pred_check
    _
  $region43: #{lstm_forward.1} parent=0 // pred_check_branch
    %667 = sbr.rel (0) target = $region45
  $region44: #{lstm_forward.1} parent=0 // pred_region
    _
  $region45: #{lstm_forward.1} parent=0 // pred_fallthru
    _
  // Predicated region
  $region46: #{lstm_forward.1} parent=0 // pred_check
    _
  $region47: #{lstm_forward.1} parent=0 // pred_check_branch
    %669 = sbr.rel (0) target = $region49
  $region48: #{lstm_forward.1} parent=0 // pred_region
    _
  $region49: #{lstm_forward.1} parent=0 // pred_fallthru
    _

</llo_original>
